<compile_context>
chip_gen: v7x
topology: tpu7x:2x2x1
jax: 0.10.0
libtpu: 0.0.40
codegen_flags: <defaults>
</compile_context>

<pallas_src>
import jax
import jax.numpy as jnp
from jax import lax
from jax.experimental import pallas as pl
from jax.experimental.pallas import tpu as pltpu

# Module constants from the PyTorch source.
BLOCK_SIZE = 256        # causal-mask capacity (tril buffer size in PyTorch)
N_EMBD = 384
DROPOUT_P = 0.2         # unused in eval mode


def _head_kernel(x_ref, wkqv_ref, mask_ref, o_ref):
    """One grid step == `block_b` batch rows.

    x_ref    : (Bt, T, C)   VMEM, compute dtype (bf16)
    wkqv_ref : (C, 3H)      VMEM, compute dtype, resident across steps
    mask_ref : (T, T)       VMEM f32 additive causal mask (0 / -1e30), resident
    o_ref    : (Bt, T, H)   VMEM, output dtype
    """
    h = wkqv_ref.shape[1] // 3

    x = x_ref[...]                       # (Bt, T, C), native compute dtype
    w = wkqv_ref[...]                    # (C, 3H)

    # Fused K/Q/V projection: single MXU contraction over C, f32 accumulation.
    kqv = lax.dot_general(
        x, w,
        dimension_numbers=(((2,), (0,)), ((), ())),
        preferred_element_type=jnp.float32)        # (Bt, T, 3H)
    kqv = kqv.astype(x.dtype)
    k = kqv[:, :, 0 * h:1 * h]                     # (Bt, T, H)
    q = kqv[:, :, 1 * h:2 * h]
    v = kqv[:, :, 2 * h:3 * h]

    # Scale q (T*H elements) instead of the (T,T) score matrix.
    q = q * (h ** -0.5)

    # Attention scores: batched contraction over the head dim (no explicit
    # transpose of k). Result is f32.
    wei = lax.dot_general(
        q, k,
        dimension_numbers=(((2,), (2,)), ((0,), (0,))),
        preferred_element_type=jnp.float32)        # (Bt, T, T)

    # Causal mask: additive, precomputed once on the host side.
    wei = wei + mask_ref[...]

    # Softmax with deferred normalization.
    wei = wei - jnp.max(wei, axis=-1, keepdims=True)
    p = jnp.exp(wei)
    s = jnp.sum(p, axis=-1, keepdims=True)         # (Bt, T, 1)

    # Dropout (eval mode): identity.

    out = lax.dot_general(
        p.astype(v.dtype), v,
        dimension_numbers=(((2,), (1,)), ((0,), (0,))),
        preferred_element_type=jnp.float32)        # (Bt, T, H)

    out = out * pl.reciprocal(s, approx=True)      # EUP, co-issues with MXU drain
    o_ref[...] = out.astype(o_ref.dtype)


def head_forward(x, w_key, w_query, w_value, *, block_b=None,
                 compute_dtype=jnp.bfloat16):
    """x: (B, T, C);  w_*: (C, head_size).  Returns (B, T, head_size)."""
    B, T, C = x.shape
    H = w_key.shape[1]
    assert T <= BLOCK_SIZE
    assert w_key.shape == w_query.shape == w_value.shape == (C, H)

    out_dtype = x.dtype

    if block_b is None:
        # Largest divisor of B (<= 8) that still leaves >= 2 grid steps, so
        # both v7x TensorCores get work; fall back to all of B if impossible.
        block_b = next((c for c in range(min(B, 8), 0, -1)
                        if B % c == 0 and B // c >= 2), B)
    assert B % block_b == 0

    # Cast once in the wrapper: bf16 MXU inputs, halved HBM->VMEM traffic.
    xc = x.astype(compute_dtype)
    w_kqv = jnp.concatenate([w_key, w_query, w_value],
                            axis=1).astype(compute_dtype)       # (C, 3H)
    # Additive causal mask (tril[:T, :T]): 0 where allowed, -1e30 where masked.
    mask = jnp.where(jnp.tril(jnp.ones((T, T), dtype=bool)),
                     0.0, -1e30).astype(jnp.float32)

    grid_spec = pltpu.PrefetchScalarGridSpec(
        num_scalar_prefetch=0,
        grid=(B // block_b,),
        in_specs=[
            pl.BlockSpec((block_b, T, C), lambda b: (b, 0, 0)),  # x rows
            pl.BlockSpec((C, 3 * H), lambda b: (0, 0)),           # fused W
            pl.BlockSpec((T, T), lambda b: (0, 0)),               # causal mask
        ],
        out_specs=pl.BlockSpec((block_b, T, H), lambda b: (b, 0, 0)),
    )

    return pl.pallas_call(
        _head_kernel,
        out_shape=jax.ShapeDtypeStruct((B, T, H), out_dtype),
        grid_spec=grid_spec,
        compiler_params=pltpu.CompilerParams(
            dimension_semantics=("parallel",)),
    )(xc, w_kqv, mask)


def head_reference(x, w_key, w_query, w_value):
    """Pure-JAX f32 reference mirroring the PyTorch forward (eval mode)."""
    B, T, C = x.shape
    k = x @ w_key
    q = x @ w_query
    v = x @ w_value
    wei = (q @ jnp.swapaxes(k, -2, -1)) * (k.shape[-1] ** -0.5)
    tril = jnp.tril(jnp.ones((T, T), dtype=bool))
    wei = jnp.where(tril[None, :, :], wei, -jnp.inf)
    wei = jax.nn.softmax(wei, axis=2)
    return wei @ v


if __name__ == "__main__":
    # Small, deterministic example consistent with the module: B=2, T=8,
    # C=n_embd=384, head_size=64.
    B, T, C, head_size = 2, 8, N_EMBD, 64

    key = jax.random.PRNGKey(0)
    kx, kk, kq, kv = jax.random.split(key, 4)

    x = jax.random.normal(kx, (B, T, C), dtype=jnp.float32)

    # nn.Linear(n_embd, head_size, bias=False) default init:
    # U(-1/sqrt(in_features), 1/sqrt(in_features)); stored transposed (C, H).
    bound = 1.0 / (C ** 0.5)
    w_key = jax.random.uniform(kk, (C, head_size), jnp.float32, -bound, bound)
    w_query = jax.random.uniform(kq, (C, head_size), jnp.float32, -bound, bound)
    w_value = jax.random.uniform(kv, (C, head_size), jnp.float32, -bound, bound)

    out = head_forward(x, w_key, w_query, w_value)
    out = jax.block_until_ready(out)

    ref = head_reference(x, w_key, w_query, w_value)
    assert out.shape == (B, T, head_size)
    # bf16 MXU inputs + approx reciprocal => ~1e-2-level agreement vs f32 ref.
    assert jnp.allclose(out, ref, atol=3e-2, rtol=3e-2), "mismatch vs reference"

    print("KERNEL_OK")
</pallas_src>

<mosaic_0001>
module attributes {stable_mosaic.version = 11 : i64} {
  func.func @_head_kernel(%arg0: i32, %arg1: memref<1x8x384xbf16, #tpu.memory_space<vmem>>, %arg2: memref<384x192xbf16, #tpu.memory_space<vmem>>, %arg3: memref<8x8xf32, #tpu.memory_space<vmem>>, %arg4: memref<1x8x64xf32, #tpu.memory_space<vmem>>) attributes {dimension_semantics = [#tpu.dimension_semantics<parallel>], iteration_bounds = array<i64: 2>, scalar_prefetch = 0 : i64, scratch_operands = 0 : i64, tpu.core_type = #tpu.core_type<tc>, window_params = [{transform_indices = @transform_0, window_bounds = array<i64: 1, 8, 384>}, {pipeline_mode = #tpu.pipeline_mode<synchronous>, transform_indices = @transform_1, window_bounds = array<i64: 384, 192>}, {pipeline_mode = #tpu.pipeline_mode<synchronous>, transform_indices = @transform_2, window_bounds = array<i64: 8, 8>}, {transform_indices = @transform_3, window_bounds = array<i64: 1, 8, 64>}]} {
    %c0 = arith.constant 0 : index
    %c0_0 = arith.constant 0 : index
    %c0_1 = arith.constant 0 : index
    %0 = vector.load %arg1[%c0, %c0_0, %c0_1] : memref<1x8x384xbf16, #tpu.memory_space<vmem>>, vector<1x8x384xbf16>
    %c0_2 = arith.constant 0 : index
    %c0_3 = arith.constant 0 : index
    %1 = vector.load %arg2[%c0_2, %c0_3] : memref<384x192xbf16, #tpu.memory_space<vmem>>, vector<384x192xbf16>
    %cst = arith.constant dense<0.000000e+00> : vector<1x8x192xf32>
    %2 = tpu.matmul %0, %1, %cst {dimension_numbers = #tpu.dot_dimension_numbers<[2], [0], [0, 1], [1], [0, 0, 0, 1, 1, 1], [], []>} : vector<1x8x384xbf16>, vector<384x192xbf16>, vector<1x8x192xf32> -> vector<1x8x192xf32>
    %3 = arith.truncf %2 : vector<1x8x192xf32> to vector<1x8x192xbf16>
    %4 = vector.extract_strided_slice %3 {offsets = [0, 0, 0], sizes = [1, 8, 64], strides = [1, 1, 1]} : vector<1x8x192xbf16> to vector<1x8x64xbf16>
    %5 = vector.extract_strided_slice %3 {offsets = [0, 0, 64], sizes = [1, 8, 64], strides = [1, 1, 1]} : vector<1x8x192xbf16> to vector<1x8x64xbf16>
    %6 = vector.extract_strided_slice %3 {offsets = [0, 0, 128], sizes = [1, 8, 64], strides = [1, 1, 1]} : vector<1x8x192xbf16> to vector<1x8x64xbf16>
    %cst_4 = arith.constant 1.250000e-01 : bf16
    %7 = vector.broadcast %cst_4 : bf16 to vector<1x8x64xbf16>
    %8 = arith.mulf %5, %7 : vector<1x8x64xbf16>
    %cst_5 = arith.constant dense<0.000000e+00> : vector<1x8x8xf32>
    %9 = tpu.matmul %8, %4, %cst_5 {dimension_numbers = #tpu.dot_dimension_numbers<[2], [2], [1], [1], [0, 0, 0, 1, 1, 1], [0], [0]>} : vector<1x8x64xbf16>, vector<1x8x64xbf16>, vector<1x8x8xf32> -> vector<1x8x8xf32>
    %c0_6 = arith.constant 0 : index
    %c0_7 = arith.constant 0 : index
    %10 = vector.load %arg3[%c0_6, %c0_7] : memref<8x8xf32, #tpu.memory_space<vmem>>, vector<8x8xf32>
    %11 = vector.shape_cast %10 : vector<8x8xf32> to vector<1x8x8xf32>
    %12 = arith.addf %9, %11 : vector<1x8x8xf32>
    %cst_8 = arith.constant dense<0xFF800000> : vector<1x8xf32>
    %13 = vector.multi_reduction <maximumf>, %12, %cst_8 [2] : vector<1x8x8xf32> to vector<1x8xf32>
    %14 = vector.shape_cast %13 : vector<1x8xf32> to vector<1x8x1xf32>
    %15 = vector.broadcast %14 : vector<1x8x1xf32> to vector<1x8x8xf32>
    %16 = arith.subf %12, %15 : vector<1x8x8xf32>
    %17 = math.exp %16 : vector<1x8x8xf32>
    %cst_9 = arith.constant dense<0.000000e+00> : vector<1x8xf32>
    %18 = vector.multi_reduction <add>, %17, %cst_9 [2] : vector<1x8x8xf32> to vector<1x8xf32>
    %19 = vector.shape_cast %18 : vector<1x8xf32> to vector<1x8x1xf32>
    %20 = arith.truncf %17 : vector<1x8x8xf32> to vector<1x8x8xbf16>
    %cst_10 = arith.constant dense<0.000000e+00> : vector<1x8x64xf32>
    %21 = tpu.matmul %20, %6, %cst_10 {dimension_numbers = #tpu.dot_dimension_numbers<[2], [1], [1], [2], [0, 0, 0, 1, 1, 2], [0], [0]>} : vector<1x8x8xbf16>, vector<1x8x64xbf16>, vector<1x8x64xf32> -> vector<1x8x64xf32>
    %22 = tpu.reciprocal %19 {approx = true} : vector<1x8x1xf32> -> vector<1x8x1xf32>
    %23 = vector.broadcast %22 : vector<1x8x1xf32> to vector<1x8x64xf32>
    %24 = arith.mulf %21, %23 : vector<1x8x64xf32>
    %c0_11 = arith.constant 0 : index
    %c0_12 = arith.constant 0 : index
    %c0_13 = arith.constant 0 : index
    %25 = vector.load %arg4[%c0_11, %c0_12, %c0_13] : memref<1x8x64xf32, #tpu.memory_space<vmem>>, vector<1x8x64xf32>
    tpu.vector_store %arg4[%c0_11, %c0_12, %c0_13], %24 {strides = array<i32>} : memref<1x8x64xf32, #tpu.memory_space<vmem>>, vector<1x8x64xf32>,
    return
  }
  func.func @transform_0(%arg0: i32) -> (i32, i32, i32) {
    %c0_i32 = arith.constant 0 : i32
    %c0_i32_0 = arith.constant 0 : i32
    %c0_i32_1 = arith.constant 0 : i32
    return %arg0, %c0_i32, %c0_i32_0 : i32, i32, i32
  }
  func.func @transform_1(%arg0: i32) -> (i32, i32) {
    %c0_i32 = arith.constant 0 : i32
    %c0_i32_0 = arith.constant 0 : i32
    %c0_i32_1 = arith.constant 0 : i32
    return %c0_i32, %c0_i32_0 : i32, i32
  }
  func.func @transform_2(%arg0: i32) -> (i32, i32) {
    %c0_i32 = arith.constant 0 : i32
    %c0_i32_0 = arith.constant 0 : i32
    %c0_i32_1 = arith.constant 0 : i32
    return %c0_i32, %c0_i32_0 : i32, i32
  }
  func.func @transform_3(%arg0: i32) -> (i32, i32, i32) {
    %c0_i32 = arith.constant 0 : i32
    %c0_i32_0 = arith.constant 0 : i32
    %c0_i32_1 = arith.constant 0 : i32
    return %arg0, %c0_i32, %c0_i32_0 : i32, i32, i32
  }
}

</mosaic_0001>

<llo_original>
// kernel: tpu_custom_call.1
$region0: #{tpu_custom_call.1}
  #allocation0 [shape = 'u32[]', space=smem, size = 0x4, offset = 0x4, fixed_abs, tag = 'smem constant byte address 0x4 - core index']
  #allocation1 [shape = 'u32[144,128]{1,0:T(1,128)}', space=vmem, size = 0x12000, scoped, tag = 'internal scratch']
  %s0 = inlined_call_operand.vmem [shape: bf16[2,8,384], index: 0, kind: input, shape index: {}]
  %s1 = inlined_call_operand.vmem [shape: bf16[384,192], index: 1, kind: input, shape index: {}]
  %s2 = inlined_call_operand.vmem [shape: f32[8,8], index: 2, kind: input, shape index: {}]
  %s3 = inlined_call_operand.hbm [shape: f32[2,8,64], index: 3, kind: output, shape index: {}]
  %s4 = sld [smem:[#allocation0]]
  $region45: #{tpu_custom_call.1} parent=0
    _
  %s6 = ssub.s32 1, %s4
  %s7 = scalar_select 0, %s6, %s4
  $region1: #{tpu_custom_call.1} parent=0
    #allocation2 [shape = 'u8[8192]{0}', space=vmem, size = 0x2000, scoped, tag = 'output window, operand 0']
    #allocation3 [shape = 's32[2]{0}', space=sflag, size = 0x8, scoped, tag = 'scoped memory for tpu_custom_call.1']
    %8 = vsyncpa [#allocation3], 0
    %s9 = scalar_lea.sflag [#allocation3], 1
    %10 = vsyncpa %s9, 0
    loop: start=0, step=1, limit=4
    $region2: #{tpu_custom_call.1} parent=1 // loop_pre_header
      _
    $region3: #{tpu_custom_call.1} parent=1 // loop_header
      %s12 = sphi 0, %s16
      %p13 = scmp.ge.s32.totalorder %s12, 4
      %s22 = sphi 0, %s24
      %s25 = sphi 0, %s22
      %s26 = sphi 0, %s25
      %s42 = sphi 0, %s26
      %s46 = sphi 0, %s46
      %s48 = sphi 0, %s46
      %s49 = sphi 0, %s48
      %s63 = sphi 0, %s49
      %s67 = sphi 0, %s67
      %s69 = sphi 0, %s67
      %s70 = sphi 0, %s69
      %s84 = sphi 0, %s70
      %s90 = sphi 0, %s92
      %s93 = sphi 0, %s90
      %s94 = sphi 0, %s93
      %s110 = sphi 0, %s94
    $region4: #{tpu_custom_call.1} parent=1 // loop_header_branch
      %15 = sbr.rel (%p13) target = $region8
    $region5: #{tpu_custom_call.1} parent=1 // loop_body
      %s17 = ssub.s32 %s12, 1
      %s18 = ssub.s32 %s12, 2
      %s19 = sadd.s32 %s12, 1
      %s20 = ssub.s32 %s12, %s19
      %p21 = scmp.eq.s32.totalorder %s20, 0
      %s23 = sadd.s32 %s22, 1
      %s24 = scalar_select %p21, %s22, %s23
      %p27 = pneg %p21
      %p28 = scmp.eq.s32.totalorder %s12, 1
      %p29 = por %p27, %p28
      %p30 = scmp.ne.s32.totalorder %s22, %s25
      %p31 = scmp.eq.s32.totalorder %s12, 0
      %p32 = por %p30, %p31
      %p33 = scmp.ne.s32.totalorder %s22, %s25
      %p34 = scmp.eq.s32.totalorder %s17, 1
      %p35 = por %p33, %p34
      %p36 = scmp.ne.s32.totalorder %s25, %s26
      %p37 = scmp.eq.s32.totalorder %s17, 0
      %p38 = por %p36, %p37
      %p39 = scmp.ne.s32.totalorder %s25, %s26
      %p40 = scmp.eq.s32.totalorder %s18, 1
      %p41 = por %p39, %p40
      %p43 = scmp.ne.s32.totalorder %s26, %s42
      %p44 = scmp.eq.s32.totalorder %s18, 0
      %p45 = por %p43, %p44
      %s47 = sadd.s32 %s46, 1
      %p50 = scmp.eq.s32.totalorder %s12, 1
      %p51 = scmp.ne.s32.totalorder %s46, %s48
      %p52 = scmp.eq.s32.totalorder %s12, 0
      %p53 = por %p51, %p52
      %p54 = scmp.ne.s32.totalorder %s46, %s48
      %p55 = scmp.eq.s32.totalorder %s17, 1
      %p56 = por %p54, %p55
      %p57 = scmp.ne.s32.totalorder %s48, %s49
      %p58 = scmp.eq.s32.totalorder %s17, 0
      %p59 = por %p57, %p58
      %p60 = scmp.ne.s32.totalorder %s48, %s49
      %p61 = scmp.eq.s32.totalorder %s18, 1
      %p62 = por %p60, %p61
      %p64 = scmp.ne.s32.totalorder %s49, %s63
      %p65 = scmp.eq.s32.totalorder %s18, 0
      %p66 = por %p64, %p65
      %s68 = sadd.s32 %s67, 1
      %p71 = scmp.eq.s32.totalorder %s12, 1
      %p72 = scmp.ne.s32.totalorder %s67, %s69
      %p73 = scmp.eq.s32.totalorder %s12, 0
      %p74 = por %p72, %p73
      %p75 = scmp.ne.s32.totalorder %s67, %s69
      %p76 = scmp.eq.s32.totalorder %s17, 1
      %p77 = por %p75, %p76
      %p78 = scmp.ne.s32.totalorder %s69, %s70
      %p79 = scmp.eq.s32.totalorder %s17, 0
      %p80 = por %p78, %p79
      %p81 = scmp.ne.s32.totalorder %s69, %s70
      %p82 = scmp.eq.s32.totalorder %s18, 1
      %p83 = por %p81, %p82
      %p85 = scmp.ne.s32.totalorder %s70, %s84
      %p86 = scmp.eq.s32.totalorder %s18, 0
      %p87 = por %p85, %p86
      %s88 = ssub.s32 %s12, %s19
      %p89 = scmp.eq.s32.totalorder %s88, 0
      %s91 = sadd.s32 %s90, 1
      %s92 = scalar_select %p89, %s90, %s91
      %p95 = pneg %p89
      %p96 = scmp.eq.s32.totalorder %s12, 1
      %p97 = por %p95, %p96
      %p98 = scmp.ne.s32.totalorder %s90, %s93
      %p99 = scmp.eq.s32.totalorder %s12, 0
      %p100 = por %p98, %p99
      %p101 = scmp.ne.s32.totalorder %s90, %s93
      %p102 = scmp.eq.s32.totalorder %s17, 1
      %p103 = por %p101, %p102
      %p104 = scmp.ne.s32.totalorder %s93, %s94
      %p105 = scmp.eq.s32.totalorder %s17, 0
      %p106 = por %p104, %p105
      %p107 = scmp.ne.s32.totalorder %s93, %s94
      %p108 = scmp.eq.s32.totalorder %s18, 1
      %p109 = por %p107, %p108
      %p111 = scmp.ne.s32.totalorder %s94, %s110
      %p112 = scmp.eq.s32.totalorder %s18, 0
      %p113 = por %p111, %p112
      %p114 = scmp.le.s32.totalorder 1, %s12
      %p115 = scmp.lt.s32.totalorder %s12, 3
      %p116 = pnand %p114, %p115
      %p117 = pneg %p116
      // Predicated region
      $region9: #{tpu_custom_call.1} parent=5 // pred_check
        _
      $region10: #{tpu_custom_call.1} parent=5 // pred_check_branch
        %119 = sbr.rel (%p116) target = $region12
      $region11: #{tpu_custom_call.1} parent=5 // pred_region
        %s120 = ssub.s32 %s12, 1
        // Predicated region
        $region13: #{tpu_custom_call.1} parent=11 // pred_check
          %p121 = pneg %p59
        $region14: #{tpu_custom_call.1} parent=11 // pred_check_branch
          %123 = sbr.rel (%p121) target = $region16
        $region15: #{tpu_custom_call.1} parent=11 // pred_region
          _
        $region16: #{tpu_custom_call.1} parent=11 // pred_fallthru
          _
        // Predicated region
        $region17: #{tpu_custom_call.1} parent=11 // pred_check
          %p124 = pneg %p80
        $region18: #{tpu_custom_call.1} parent=11 // pred_check_branch
          %126 = sbr.rel (%p124) target = $region20
        $region19: #{tpu_custom_call.1} parent=11 // pred_region
          _
        $region20: #{tpu_custom_call.1} parent=11 // pred_fallthru
          _
      $region12: #{tpu_custom_call.1} parent=5 // pred_fallthru
        _
      %p127 = scmp.lt.s32.totalorder %s12, 2
      // Predicated region
      $region21: #{tpu_custom_call.1} parent=5 // pred_check
        %p128 = pneg %p127
      $region22: #{tpu_custom_call.1} parent=5 // pred_check_branch
        %130 = sbr.rel (%p128) target = $region24
      $region23: #{tpu_custom_call.1} parent=5 // pred_region
        // Predicated region
        $region25: #{tpu_custom_call.1} parent=23 // pred_check
          %p131 = pneg %p32
        $region26: #{tpu_custom_call.1} parent=23 // pred_check_branch
          %133 = sbr.rel (%p131) target = $region28
        $region27: #{tpu_custom_call.1} parent=23 // pred_region
          %p134 = scmp.lt.s32.totalorder %s12, 1
          %s135 = scalar_select %p134, %s12, 1
          %s136 = smul.addr %s135, 3
          %s137 = smul.addr %s136, 4
          %s138 = scalar_lea.vmem %s0, %s137
        $region28: #{tpu_custom_call.1} parent=23 // pred_fallthru
          _
      $region24: #{tpu_custom_call.1} parent=5 // pred_fallthru
        _
      %p139 = scmp.le.s32.totalorder 1, %s12
      %p140 = scmp.lt.s32.totalorder %s12, 3
      %p141 = pnand %p139, %p140
      %p142 = pneg %p141
      // Predicated region
      $region29: #{tpu_custom_call.1} parent=5 // pred_check
        _
      $region30: #{tpu_custom_call.1} parent=5 // pred_check_branch
        %144 = sbr.rel (%p141) target = $region32
      $region31: #{tpu_custom_call.1} parent=5 // pred_region
        %s145 = ssub.s32 %s12, 1
        %p146 = scmp.lt.s32.totalorder %s17, 1
        %s147 = scalar_select %p146, %s17, 1
        %s148 = smul.addr %s147, 3
        %s149 = smul.addr %s148, 4
        %s150 = scalar_lea.vmem %s0, %s149
        %p151 = pneg %p38
        %p152 = pneg %p35
        %p153 = pneg %p59
        %p154 = pneg %p56
        %p155 = pneg %p80
        %p156 = pneg %p77
        %p157 = pneg %p106
        %p158 = pneg %p103
        %s159 = sand.u32 %s93, 1
        %s160 = scalar_lea.sflag [#allocation3], %s159
        %s161 = sand.u32 %s93, 1
        %s162 = smul.addr %s161, 8
        %s163 = scalar_lea.vmem [#allocation2], %s162
        %p164 = scmp.lt.s32.totalorder %s17, 1
        %s165 = scalar_select %p164, %s17, 1
        %s166 = smul.addr %s165, 3
        %s167 = smul.addr %s166, 4
        %s168 = scalar_lea.vmem %s0, %s167
        %v171 = vld [vmem:[%s168] sm:$0xff]
        %v172 = vld [vmem:[%s168 + $0x8] sm:$0xf]
        %v173 = vld [vmem:[%s1] sm:$0xff]
        %v174 = vld [vmem:[%s1 + $0x8] sm:$0xff]
        %v175 = vld [vmem:[%s1 + $0x10] sm:$0xff]
        %v176 = vld [vmem:[%s1 + $0x18] sm:$0xff]
        %v177 = vld [vmem:[%s1 + $0x20] sm:$0xff]
        %v178 = vld [vmem:[%s1 + $0x28] sm:$0xff]
        %v179 = vld [vmem:[%s1 + $0x30] sm:$0xff]
        %v180 = vld [vmem:[%s1 + $0x38] sm:$0xff]
        %v181 = vld [vmem:[%s1 + $0x40] sm:$0xff]
        %v182 = vld [vmem:[%s1 + $0x48] sm:$0xff]
        %v183 = vld [vmem:[%s1 + $0x50] sm:$0xff]
        %v184 = vld [vmem:[%s1 + $0x58] sm:$0xff]
        %v185 = vld [vmem:[%s1 + $0x60] sm:$0xff]
        %v186 = vld [vmem:[%s1 + $0x68] sm:$0xff]
        %v187 = vld [vmem:[%s1 + $0x70] sm:$0xff]
        %v188 = vld [vmem:[%s1 + $0x78] sm:$0xff]
        %v189 = vld [vmem:[%s1 + $0x80] sm:$0xff]
        %v190 = vld [vmem:[%s1 + $0x88] sm:$0xff]
        %v191 = vld [vmem:[%s1 + $0x90] sm:$0xff]
        %v192 = vld [vmem:[%s1 + $0x98] sm:$0xff]
        %v193 = vld [vmem:[%s1 + $0xa0] sm:$0xff]
        %v194 = vld [vmem:[%s1 + $0xa8] sm:$0xff]
        %v195 = vld [vmem:[%s1 + $0xb0] sm:$0xff]
        %v196 = vld [vmem:[%s1 + $0xb8] sm:$0xff]
        %v197 = vld [vmem:[%s1 + $0xc0] sm:$0xff]
        %v198 = vld [vmem:[%s1 + $0xc8] sm:$0xff]
        %v199 = vld [vmem:[%s1 + $0xd0] sm:$0xff]
        %v200 = vld [vmem:[%s1 + $0xd8] sm:$0xff]
        %v201 = vld [vmem:[%s1 + $0xe0] sm:$0xff]
        %v202 = vld [vmem:[%s1 + $0xe8] sm:$0xff]
        %v203 = vld [vmem:[%s1 + $0xf0] sm:$0xff]
        %v204 = vld [vmem:[%s1 + $0xf8] sm:$0xff]
        %v205 = vld [vmem:[%s1 + $0x100] sm:$0xff]
        %v206 = vld [vmem:[%s1 + $0x108] sm:$0xff]
        %v207 = vld [vmem:[%s1 + $0x110] sm:$0xff]
        %v208 = vld [vmem:[%s1 + $0x118] sm:$0xff]
        %v209 = vld [vmem:[%s1 + $0x120] sm:$0xff]
        %v210 = vld [vmem:[%s1 + $0x128] sm:$0xff]
        %v211 = vld [vmem:[%s1 + $0x130] sm:$0xff]
        %v212 = vld [vmem:[%s1 + $0x138] sm:$0xff]
        %v213 = vld [vmem:[%s1 + $0x140] sm:$0xff]
        %v214 = vld [vmem:[%s1 + $0x148] sm:$0xff]
        %v215 = vld [vmem:[%s1 + $0x150] sm:$0xff]
        %v216 = vld [vmem:[%s1 + $0x158] sm:$0xff]
        %v217 = vld [vmem:[%s1 + $0x160] sm:$0xff]
        %v218 = vld [vmem:[%s1 + $0x168] sm:$0xff]
        %v219 = vld [vmem:[%s1 + $0x170] sm:$0xff]
        %v220 = vld [vmem:[%s1 + $0x178] sm:$0xff]
        %v223 = vunpack.c.l.b16 %v171
        %v224 = vunpack.c.h.b16 %v171
        %v225 = vunpack.c.l.b16 %v172
        %v226 = vpack.c.b16 %v223, %v223
        %v227 = vpack.c.b16 %v224, %v224
        %v228 = vpack.c.b16 %v225, %v225
        %v280 = vunpack.c.l.b16 %v173
        %v281 = vunpack.c.h.b16 %v173
        %v282 = vunpack.c.l.b16 %v174
        %v283 = vunpack.c.h.b16 %v174
        %v284 = vunpack.c.l.b16 %v175
        %v285 = vunpack.c.h.b16 %v175
        %v286 = vunpack.c.l.b16 %v176
        %v287 = vunpack.c.h.b16 %v176
        %v288 = vunpack.c.l.b16 %v177
        %v289 = vunpack.c.h.b16 %v177
        %v290 = vunpack.c.l.b16 %v178
        %v291 = vunpack.c.h.b16 %v178
        %v292 = vunpack.c.l.b16 %v179
        %v293 = vunpack.c.h.b16 %v179
        %v294 = vunpack.c.l.b16 %v180
        %v295 = vunpack.c.h.b16 %v180
        %v296 = vunpack.c.l.b16 %v181
        %v297 = vunpack.c.h.b16 %v181
        %v298 = vunpack.c.l.b16 %v182
        %v299 = vunpack.c.h.b16 %v182
        %v300 = vunpack.c.l.b16 %v183
        %v301 = vunpack.c.h.b16 %v183
        %v302 = vunpack.c.l.b16 %v184
        %v303 = vunpack.c.h.b16 %v184
        %v304 = vunpack.c.l.b16 %v185
        %v305 = vunpack.c.h.b16 %v185
        %v306 = vunpack.c.l.b16 %v186
        %v307 = vunpack.c.h.b16 %v186
        %v308 = vunpack.c.l.b16 %v187
        %v309 = vunpack.c.h.b16 %v187
        %v310 = vunpack.c.l.b16 %v188
        %v311 = vunpack.c.h.b16 %v188
        %v312 = vunpack.c.l.b16 %v189
        %v313 = vunpack.c.h.b16 %v189
        %v314 = vunpack.c.l.b16 %v190
        %v315 = vunpack.c.h.b16 %v190
        %v316 = vunpack.c.l.b16 %v191
        %v317 = vunpack.c.h.b16 %v191
        %v318 = vunpack.c.l.b16 %v192
        %v319 = vunpack.c.h.b16 %v192
        %v320 = vunpack.c.l.b16 %v193
        %v321 = vunpack.c.h.b16 %v193
        %v322 = vunpack.c.l.b16 %v194
        %v323 = vunpack.c.h.b16 %v194
        %v324 = vunpack.c.l.b16 %v195
        %v325 = vunpack.c.h.b16 %v195
        %v326 = vunpack.c.l.b16 %v196
        %v327 = vunpack.c.h.b16 %v196
        %v328 = vunpack.c.l.b16 %v197
        %v329 = vunpack.c.h.b16 %v197
        %v330 = vunpack.c.l.b16 %v198
        %v331 = vunpack.c.h.b16 %v198
        %v332 = vunpack.c.l.b16 %v199
        %v333 = vunpack.c.h.b16 %v199
        %v334 = vunpack.c.l.b16 %v200
        %v335 = vunpack.c.h.b16 %v200
        %v336 = vunpack.c.l.b16 %v201
        %v337 = vunpack.c.h.b16 %v201
        %v338 = vunpack.c.l.b16 %v202
        %v339 = vunpack.c.h.b16 %v202
        %v340 = vunpack.c.l.b16 %v203
        %v341 = vunpack.c.h.b16 %v203
        %v342 = vunpack.c.l.b16 %v204
        %v343 = vunpack.c.h.b16 %v204
        %v344 = vunpack.c.l.b16 %v205
        %v345 = vunpack.c.h.b16 %v205
        %v346 = vunpack.c.l.b16 %v206
        %v347 = vunpack.c.h.b16 %v206
        %v348 = vunpack.c.l.b16 %v207
        %v349 = vunpack.c.h.b16 %v207
        %v350 = vunpack.c.l.b16 %v208
        %v351 = vunpack.c.h.b16 %v208
        %v352 = vunpack.c.l.b16 %v209
        %v353 = vunpack.c.h.b16 %v209
        %v354 = vunpack.c.l.b16 %v210
        %v355 = vunpack.c.h.b16 %v210
        %v356 = vunpack.c.l.b16 %v211
        %v357 = vunpack.c.h.b16 %v211
        %v358 = vunpack.c.l.b16 %v212
        %v359 = vunpack.c.h.b16 %v212
        %v360 = vunpack.c.l.b16 %v213
        %v361 = vunpack.c.h.b16 %v213
        %v362 = vunpack.c.l.b16 %v214
        %v363 = vunpack.c.h.b16 %v214
        %v364 = vunpack.c.l.b16 %v215
        %v365 = vunpack.c.h.b16 %v215
        %v366 = vunpack.c.l.b16 %v216
        %v367 = vunpack.c.h.b16 %v216
        %v368 = vunpack.c.l.b16 %v217
        %v369 = vunpack.c.h.b16 %v217
        %v370 = vunpack.c.l.b16 %v218
        %v371 = vunpack.c.h.b16 %v218
        %v372 = vunpack.c.l.b16 %v219
        %v373 = vunpack.c.h.b16 %v219
        %v374 = vunpack.c.l.b16 %v220
        %v375 = vunpack.c.h.b16 %v220
        %v376 = vpack.c.b16 %v282, %v280
        %v377 = vpack.c.b16 %v283, %v281
        %v378 = vpack.c.b16 %v286, %v284
        %v379 = vpack.c.b16 %v287, %v285
        %v380 = vpack.c.b16 %v290, %v288
        %v381 = vpack.c.b16 %v291, %v289
        %v382 = vpack.c.b16 %v294, %v292
        %v383 = vpack.c.b16 %v295, %v293
        %v384 = vpack.c.b16 %v298, %v296
        %v385 = vpack.c.b16 %v299, %v297
        %v386 = vpack.c.b16 %v302, %v300
        %v387 = vpack.c.b16 %v303, %v301
        %v388 = vpack.c.b16 %v306, %v304
        %v389 = vpack.c.b16 %v307, %v305
        %v390 = vpack.c.b16 %v310, %v308
        %v391 = vpack.c.b16 %v311, %v309
        %v392 = vpack.c.b16 %v314, %v312
        %v393 = vpack.c.b16 %v315, %v313
        %v394 = vpack.c.b16 %v318, %v316
        %v395 = vpack.c.b16 %v319, %v317
        %v396 = vpack.c.b16 %v322, %v320
        %v397 = vpack.c.b16 %v323, %v321
        %v398 = vpack.c.b16 %v326, %v324
        %v399 = vpack.c.b16 %v327, %v325
        %v400 = vpack.c.b16 %v330, %v328
        %v401 = vpack.c.b16 %v331, %v329
        %v402 = vpack.c.b16 %v334, %v332
        %v403 = vpack.c.b16 %v335, %v333
        %v404 = vpack.c.b16 %v338, %v336
        %v405 = vpack.c.b16 %v339, %v337
        %v406 = vpack.c.b16 %v342, %v340
        %v407 = vpack.c.b16 %v343, %v341
        %v408 = vpack.c.b16 %v346, %v344
        %v409 = vpack.c.b16 %v347, %v345
        %v410 = vpack.c.b16 %v350, %v348
        %v411 = vpack.c.b16 %v351, %v349
        %v412 = vpack.c.b16 %v354, %v352
        %v413 = vpack.c.b16 %v355, %v353
        %v414 = vpack.c.b16 %v358, %v356
        %v415 = vpack.c.b16 %v359, %v357
        %v416 = vpack.c.b16 %v362, %v360
        %v417 = vpack.c.b16 %v363, %v361
        %v418 = vpack.c.b16 %v366, %v364
        %v419 = vpack.c.b16 %v367, %v365
        %v420 = vpack.c.b16 %v370, %v368
        %v421 = vpack.c.b16 %v371, %v369
        %v422 = vpack.c.b16 %v374, %v372
        %v423 = vpack.c.b16 %v375, %v373
        %472 = vmatprep.subr.bf16.mxu0 %v377
        %473 = vmatpush1.bf16.msra.mxu0 %v376
        %474 = vmatprep.subr.bf16.mxu0 %v379
        %475 = vmatpush1.bf16.msra.mxu0 %v378
        %476 = vmatprep.subr.bf16.mxu0 %v381
        %477 = vmatpush1.bf16.msra.mxu0 %v380
        %478 = vmatprep.subr.bf16.mxu0 %v383
        %479 = vmatpush1.bf16.msra.mxu0 %v382
        %480 = vmatprep.subr.bf16.mxu0 %v385
        %481 = vmatpush1.bf16.msra.mxu0 %v384
        %482 = vmatprep.subr.bf16.mxu0 %v387
        %483 = vmatpush1.bf16.msra.mxu0 %v386
        %484 = vmatprep.subr.bf16.mxu0 %v389
        %485 = vmatpush1.bf16.msra.mxu0 %v388
        %486 = vmatprep.subr.bf16.mxu0 %v391
        %487 = vmatpush1.bf16.msra.mxu0 %v390
        %488 = vmatprep.subr.bf16.mxu0 %v393
        %489 = vmatpush1.bf16.msra.mxu0 %v392
        %490 = vmatprep.subr.bf16.mxu0 %v395
        %491 = vmatpush1.bf16.msra.mxu0 %v394
        %492 = vmatprep.subr.bf16.mxu0 %v397
        %493 = vmatpush1.bf16.msra.mxu0 %v396
        %494 = vmatprep.subr.bf16.mxu0 %v399
        %495 = vmatpush1.bf16.msra.mxu0 %v398
        %496 = vmatprep.subr.bf16.mxu0 %v401
        %497 = vmatpush1.bf16.msra.mxu0 %v400
        %498 = vmatprep.subr.bf16.mxu0 %v403
        %499 = vmatpush1.bf16.msra.mxu0 %v402
        %500 = vmatprep.subr.bf16.mxu0 %v405
        %501 = vmatpush1.bf16.msra.mxu0 %v404
        %502 = vmatprep.subr.bf16.mxu0 %v407
        %503 = vmatpush1.bf16.msra.mxu0 %v406
        %504 = vmatprep.mubr.bf16.mxu0 %v227
        %505 = vmatmul.mubr.bf16.gmra.mrb[0].mxu0 %v226
        %v506 = vpop.f32.mrb[0].mxu0
        %v507 = vadd.f32 0.0, %v506
        %v508 = vpop.f32.mrb[0].mxu0
        %v509 = vadd.f32 0.0, %v508
        %v510 = vpop.f32.mrb[0].mxu0
        %v511 = vpop.f32.mrb[0].mxu0
        %512 = vdwg.mxu0
        %513 = vmatprep.subr.bf16.mxu0 %v409
        %514 = vmatpush1.bf16.msra.mxu0 %v408
        %515 = vmatprep.subr.bf16.mxu0 %v411
        %516 = vmatpush1.bf16.msra.mxu0 %v410
        %517 = vmatprep.subr.bf16.mxu0 %v413
        %518 = vmatpush1.bf16.msra.mxu0 %v412
        %519 = vmatprep.subr.bf16.mxu0 %v415
        %520 = vmatpush1.bf16.msra.mxu0 %v414
        %521 = vmatprep.subr.bf16.mxu0 %v417
        %522 = vmatpush1.bf16.msra.mxu0 %v416
        %523 = vmatprep.subr.bf16.mxu0 %v419
        %524 = vmatpush1.bf16.msra.mxu0 %v418
        %525 = vmatprep.subr.bf16.mxu0 %v421
        %526 = vmatpush1.bf16.msra.mxu0 %v420
        %527 = vmatprep.subr.bf16.mxu0 %v423
        %528 = vmatpush1.bf16.msra.mxu0 %v422
        %529 = vmatprep.subr.bf16.mxu0 0
        %530 = vmatpush1.bf16.msra.mxu0 0
        %531 = vmatprep.subr.bf16.mxu0 0
        %532 = vmatpush1.bf16.msra.mxu0 0
        %533 = vmatprep.subr.bf16.mxu0 0
        %534 = vmatpush1.bf16.msra.mxu0 0
        %535 = vmatprep.subr.bf16.mxu0 0
        %536 = vmatpush1.bf16.msra.mxu0 0
        %537 = vmatprep.subr.bf16.mxu0 0
        %538 = vmatpush1.bf16.msra.mxu0 0
        %539 = vmatprep.subr.bf16.mxu0 0
        %540 = vmatpush1.bf16.msra.mxu0 0
        %541 = vmatprep.subr.bf16.mxu0 0
        %542 = vmatpush1.bf16.msra.mxu0 0
        %543 = vmatprep.subr.bf16.mxu0 0
        %544 = vmatpush1.bf16.msra.mxu0 0
        %545 = vmatprep.mubr.bf16.mxu0 0
        %546 = vmatmul.mubr.bf16.gmra.mrb[0].mxu0 %v228
        %v547 = vpop.f32.mrb[0].mxu0
        %v548 = vadd.f32 %v507, %v547
        %v549 = vpop.f32.mrb[0].mxu0
        %v550 = vadd.f32 %v509, %v549
        %v551 = vpop.f32.mrb[0].mxu0
        %v552 = vpop.f32.mrb[0].mxu0
        %553 = vdwg.mxu0
        %v554 = vpack.c.bf16 %v548, %v548
        %v555 = vpack.c.bf16 %v550, %v550
        %v556 = vmul.bf16 %v554, 1040203264
        %v557 = vld [vmem:[%s2] sm:$0xff]
        %559 = vrot.lane.b32.xlu0 %v556, 64
        %v560 = vpop.permute.xlu0 %559
        %vm561 = vcmask 523264
        %v563 = vsel %vm561, %v560, 0
        %v566 = vsel %vm561, %v554, 0
        %568 = vmatprep.subr.bf16.mxu0 0
        %569 = vmatpush1.bf16.xpose.msra.mxu0 %v566
        %570 = vmatprep.subr.bf16.mxu0 0
        %571 = vmatpush1.bf16.xpose.msra.mxu0 0
        %572 = vmatprep.subr.bf16.mxu0 0
        %573 = vmatpush1.bf16.xpose.msra.mxu0 0
        %574 = vmatprep.subr.bf16.mxu0 0
        %575 = vmatpush1.bf16.xpose.msra.mxu0 0
        %576 = vmatprep.subr.bf16.mxu0 0
        %577 = vmatpush1.bf16.xpose.msra.mxu0 0
        %578 = vmatprep.subr.bf16.mxu0 0
        %579 = vmatpush1.bf16.xpose.msra.mxu0 0
        %580 = vmatprep.subr.bf16.mxu0 0
        %581 = vmatpush1.bf16.xpose.msra.mxu0 0
        %582 = vmatprep.subr.bf16.mxu0 0
        %583 = vmatpush1.bf16.xpose.msra.mxu0 0
        %584 = vmatprep.subr.bf16.mxu0 0
        %585 = vmatpush1.bf16.xpose.msra.mxu0 0
        %586 = vmatprep.subr.bf16.mxu0 0
        %587 = vmatpush1.bf16.xpose.msra.mxu0 0
        %588 = vmatprep.subr.bf16.mxu0 0
        %589 = vmatpush1.bf16.xpose.msra.mxu0 0
        %590 = vmatprep.subr.bf16.mxu0 0
        %591 = vmatpush1.bf16.xpose.msra.mxu0 0
        %592 = vmatprep.subr.bf16.mxu0 0
        %593 = vmatpush1.bf16.xpose.msra.mxu0 0
        %594 = vmatprep.subr.bf16.mxu0 0
        %595 = vmatpush1.bf16.xpose.msra.mxu0 0
        %596 = vmatprep.subr.bf16.mxu0 0
        %597 = vmatpush1.bf16.xpose.msra.mxu0 0
        %598 = vmatprep.subr.bf16.mxu0 0
        %599 = vmatpush1.bf16.xpose.msra.mxu0 0
        %600 = vmatprep.mubr.bf16.mxu0 0
        %601 = vmatmul.mubr.bf16.gmra.mrb[0].mxu0 %v563
        %v602 = vpop.f32.mrb[0].mxu0
        %v603 = vadd.f32 %v557, %v602
        %v604 = vpop.f32.mrb[0].mxu0
        %v605 = vpop.f32.mrb[0].mxu0
        %v606 = vpop.f32.mrb[0].mxu0
        %607 = vdwg.mxu0
        %vm608 = vcmask 64512
        %v609 = vsel %vm608, %v603, -inf
        %610 = vmax.xlane.f32.xlu0 %v609
        %v611 = vpop.xlane.xlu0 %610
        %v612 = vsub.f32 %v603, %v611
        %v613 = vmul.f32 %v612, 1.442695
        %v614 = vpow.pop %v613
        %v615 = vsel %vm608, %v614, 0.0
        %616 = vadd.xlane.f32.xlu0 %v615
        %v617 = vpop.xlane.xlu0 %616
        %v618 = vpack.c.bf16 %v614, %v614
        %v620 = vsel %vm608, %v618, 0
        %vm622 = vcmask 1043456
        %v624 = vsel %vm622, %v555, 0
        %626 = vmatprep.subr.bf16.mxu0 0
        %627 = vmatpush1.bf16.msra.mxu0 %v624
        %628 = vmatprep.subr.bf16.mxu0 0
        %629 = vmatpush1.bf16.msra.mxu0 0
        %630 = vmatprep.subr.bf16.mxu0 0
        %631 = vmatpush1.bf16.msra.mxu0 0
        %632 = vmatprep.subr.bf16.mxu0 0
        %633 = vmatpush1.bf16.msra.mxu0 0
        %634 = vmatprep.subr.bf16.mxu0 0
        %635 = vmatpush1.bf16.msra.mxu0 0
        %636 = vmatprep.subr.bf16.mxu0 0
        %637 = vmatpush1.bf16.msra.mxu0 0
        %638 = vmatprep.subr.bf16.mxu0 0
        %639 = vmatpush1.bf16.msra.mxu0 0
        %640 = vmatprep.subr.bf16.mxu0 0
        %641 = vmatpush1.bf16.msra.mxu0 0
        %642 = vmatprep.subr.bf16.mxu0 0
        %643 = vmatpush1.bf16.msra.mxu0 0
        %644 = vmatprep.subr.bf16.mxu0 0
        %645 = vmatpush1.bf16.msra.mxu0 0
        %646 = vmatprep.subr.bf16.mxu0 0
        %647 = vmatpush1.bf16.msra.mxu0 0
        %648 = vmatprep.subr.bf16.mxu0 0
        %649 = vmatpush1.bf16.msra.mxu0 0
        %650 = vmatprep.subr.bf16.mxu0 0
        %651 = vmatpush1.bf16.msra.mxu0 0
        %652 = vmatprep.subr.bf16.mxu0 0
        %653 = vmatpush1.bf16.msra.mxu0 0
        %654 = vmatprep.subr.bf16.mxu0 0
        %655 = vmatpush1.bf16.msra.mxu0 0
        %656 = vmatprep.subr.bf16.mxu0 0
        %657 = vmatpush1.bf16.msra.mxu0 0
        %658 = vmatprep.mubr.bf16.mxu0 0
        %659 = vmatmul.mubr.bf16.gmra.mrb[0].mxu0 %v620
        %v660 = vpop.f32.mrb[0].mxu0
        %v661 = vadd.f32 0.0, %v660
        %v662 = vpop.f32.mrb[0].mxu0
        %v663 = vpop.f32.mrb[0].mxu0
        %v664 = vpop.f32.mrb[0].mxu0
        %665 = vdwg.mxu0
        %v666 = vrcp.pop %v617
        %v667 = vmul.f32 %v661, %v666
        %668 = vst.msk [vmem:[%s163] sm:$0xff] %vm561, %v667
        %s669 = sand.u32 %s93, 1
        %s670 = scalar_lea.sflag [#allocation3], %s669
        %s671 = sand.u32 %s93, 1
        %s672 = smul.addr %s671, 8
        %s673 = scalar_lea.vmem [#allocation2], %s672
        // Predicated region
        $region33: #{tpu_custom_call.1} parent=31 // pred_check
          %p674 = pneg %p103
        $region34: #{tpu_custom_call.1} parent=31 // pred_check_branch
          %676 = sbr.rel (%p674) target = $region36
        $region35: #{tpu_custom_call.1} parent=31 // pred_region
          %s678 = ssub.s32 128, 128
          %679 = vsyncadd %s670, %s678
          %s680 = smul.addr %s17, 128
          %s681 = scalar_lea.hbm %s3, %s680
          %s683 = sshll.u32 %s673, 4
          %s684 = int_to_ptr.vmem [resolvable:$true] %s683
          %686 = dma.vmem_to_hbm [thread:$0]  %s684, 128, %s681, %s670
        $region36: #{tpu_custom_call.1} parent=31 // pred_fallthru
          _
      $region32: #{tpu_custom_call.1} parent=5 // pred_fallthru
        _
      %p687 = scmp.le.s32.totalorder 2, %s12
      // Predicated region
      $region37: #{tpu_custom_call.1} parent=5 // pred_check
        %p688 = pneg %p687
      $region38: #{tpu_custom_call.1} parent=5 // pred_check_branch
        %690 = sbr.rel (%p688) target = $region40
      $region39: #{tpu_custom_call.1} parent=5 // pred_region
        %s691 = ssub.s32 %s12, 2
        // Predicated region
        $region41: #{tpu_custom_call.1} parent=39 // pred_check
          %p692 = pneg %p109
        $region42: #{tpu_custom_call.1} parent=39 // pred_check_branch
          %694 = sbr.rel (%p692) target = $region44
        $region43: #{tpu_custom_call.1} parent=39 // pred_region
          %s695 = sand.u32 %s94, 1
          %s696 = scalar_lea.sflag [#allocation3], %s695
          %s697 = sand.u32 %s94, 1
          %s698 = smul.addr %s697, 8
          %s699 = scalar_lea.vmem [#allocation2], %s698
          %700 = dma.done %s696, 128
        $region44: #{tpu_custom_call.1} parent=39 // pred_fallthru
          _
      $region40: #{tpu_custom_call.1} parent=5 // pred_fallthru
        _
    $region6: #{tpu_custom_call.1} parent=1 // loop_footer
      %s16 = sadd.s32 1, %s12
    $region7: #{tpu_custom_call.1} parent=1 // loop_footer_branch
      %11 = sbr.rel target = $region3
    $region8: #{tpu_custom_call.1} parent=1 // loop_exit
      _
    %701 = vsyncpa [#allocation3], 1
    %s702 = scalar_lea.sflag [#allocation3], 1
    %703 = vsyncpa %s702, 1

</llo_original>
